<compile_context>
chip_gen: v5e
topology: v5e:2x2
jax: 0.10.0
libtpu: 0.0.40
codegen_flags: <defaults>
</compile_context>

<pallas_src>
import functools

import jax
import jax.numpy as jnp
from jax.experimental import pallas as pl
from jax.experimental.pallas import tpu as pltpu


def _round_up(n: int, m: int) -> int:
    return ((n + m - 1) // m) * m


def mlp_kernel(x_ref, w1_ref, b1_ref, w2_ref, b2_ref, o_ref):
    # x_ref : (10, TB)  batch tile on lanes (f32 or bf16)
    # w1_ref: (50, 10)  fc1 weight, PyTorch (out, in) layout (same dtype as x)
    # b1_ref: (50, 1)   fc1 bias as a column, f32
    # w2_ref: (1, 50)   fc2 weight as a row, f32
    # b2_ref: (1,)      fc2 bias, scalar in SMEM, f32
    # o_ref : (1, TB)   f32
    h = jnp.dot(w1_ref[...], x_ref[...], preferred_element_type=jnp.float32)   # (50, TB) MXU
    h = jnp.maximum(h + b1_ref[...], 0.0)                                      # bias + ReLU, VPU
    # fc2 contraction on the MXU (it is idle after fc1); keeps VPU/XLU slots free.
    y = jnp.dot(w2_ref[...], h, preferred_element_type=jnp.float32)            # (1, TB)
    o_ref[...] = (y + b2_ref[0]).astype(o_ref.dtype)


@functools.partial(jax.jit, static_argnames=("tb_max", "compute_dtype"))
def solar_forecast_forward(x, w1, b1, w2, b2, *, tb_max=32768,
                           compute_dtype=jnp.float32):
    """Forward pass of SolarForecastModel.

    Args:
      x : (B, 10) float32 (same layout as the PyTorch module input).
      w1: (50, 10), b1: (50,)  -- fc1 params, PyTorch layout.
      w2: (1, 50),  b2: (1,)   -- fc2 params, PyTorch layout.
      tb_max: max batch-tile (lane) width; forced to a multiple of 128.
      compute_dtype: dtype used to stream x / w1 (jnp.float32 for tight PyTorch
        parity, jnp.bfloat16 to halve HBM traffic; accumulation is always f32).
    Returns:
      (B, 1) float32.
    """
    B = x.shape[0]
    compute_dtype = jnp.dtype(compute_dtype)

    # Tile sizing:
    #  - multiple of 128 lanes (BlockSpec divisibility),
    #  - large enough to amortize the ~0.35 us per-grid-step overhead (>=1 MiB x tile for big B),
    #  - capped at ~ceil(B/4) so large batches still produce >=4 grid steps and v7x's two
    #    TensorCores both get work via the "parallel" grid axis.
    tb_max = max(128, _round_up(int(tb_max), 128))
    tb = min(tb_max, max(128, _round_up(pl.cdiv(B, 4), 128)))
    b_pad = _round_up(B, tb)
    num_steps = b_pad // tb

    # One-time layout plumbing: batch onto the lane axis, pad to whole tiles.
    # The compute_dtype cast is fused into this pass so its HBM write shrinks with the dtype.
    x_t = jnp.pad(x.astype(compute_dtype).T, ((0, 0), (0, b_pad - B)))   # (10, B_pad)
    w1_c = w1.astype(compute_dtype)                                      # (50, 10)
    b1_c = b1.reshape(50, 1).astype(jnp.float32)                         # (50, 1)
    w2_r = w2.reshape(1, 50).astype(jnp.float32)                         # (1, 50)
    b2_s = b2.reshape(1).astype(jnp.float32)                             # (1,)

    itemsize = compute_dtype.itemsize
    cost = pl.CostEstimate(
        flops=2 * b_pad * (10 * 50 + 50),
        transcendentals=0,
        bytes_accessed=(10 * b_pad * itemsize      # x stream in
                        + 1 * b_pad * 4            # output stream out
                        + 50 * 10 * itemsize + 50 * 4 + 50 * 4 + 4),   # params (once)
    )

    # Deeper pipelining only pays when tiles are small and there are several grid steps;
    # buffers are tiny so the extra VMEM is free on every generation.
    x_spec_kwargs = {}
    if tb <= 8192 and num_steps >= 3:
        x_spec_kwargs["pipeline_mode"] = pl.Buffered(3)

    out = pl.pallas_call(
        mlp_kernel,
        out_shape=jax.ShapeDtypeStruct((1, b_pad), jnp.float32),
        grid=(num_steps,),
        in_specs=[
            # Batch-tiled activations: pipelined by Pallas, lane-dense.
            pl.BlockSpec((10, tb), lambda i: (0, i), **x_spec_kwargs),
            # Weights / biases: constant index_map -> VMEM-resident, no re-DMA per step.
            pl.BlockSpec((50, 10), lambda i: (0, 0)),
            pl.BlockSpec((50, 1), lambda i: (0, 0)),
            pl.BlockSpec((1, 50), lambda i: (0, 0)),
            # Scalar bias in SMEM as a 1-D ref (2-D SMEM would pad to an (8,128)-word slab).
            pl.BlockSpec(memory_space=pltpu.MemorySpace.SMEM),
        ],
        out_specs=pl.BlockSpec((1, tb), lambda i: (0, i)),
        compiler_params=pltpu.CompilerParams(
            # Independent batch tiles: shards grid steps across both TCs on v7x,
            # harmless no-op on single-TC v5e/v6e.
            dimension_semantics=("parallel",),
        ),
        cost_estimate=cost,
    )(x_t, w1_c, b1_c, w2_r, b2_s)

    # Padded batch columns compute relu(b1)·w2 + b2 != 0; the slice removes them — keep it.
    return out[:, :B].T                                                   # (B, 1)


def init_params(key):
    # Deterministic synthetic init mimicking nn.Linear's uniform(-1/sqrt(fan_in), 1/sqrt(fan_in)),
    # stored in PyTorch layout: weight (out_features, in_features), bias (out_features,).
    k1, k2, k3, k4 = jax.random.split(key, 4)
    bound1 = 1.0 / jnp.sqrt(10.0)
    bound2 = 1.0 / jnp.sqrt(50.0)
    w1 = jax.random.uniform(k1, (50, 10), jnp.float32, -bound1, bound1)
    b1 = jax.random.uniform(k2, (50,), jnp.float32, -bound1, bound1)
    w2 = jax.random.uniform(k3, (1, 50), jnp.float32, -bound2, bound2)
    b2 = jax.random.uniform(k4, (1,), jnp.float32, -bound2, bound2)
    return w1, b1, w2, b2


def _reference(x, w1, b1, w2, b2):
    hp = jax.lax.Precision.HIGHEST
    h = jnp.maximum(jnp.dot(x, w1.T, precision=hp) + b1, 0.0)
    return jnp.dot(h, w2.T, precision=hp) + b2


if __name__ == "__main__":
    key = jax.random.PRNGKey(0)
    kx, kx2, kp = jax.random.split(key, 3)
    w1, b1, w2, b2 = init_params(kp)

    # 1) Small batch, f32 streaming: tight parity with the PyTorch forward.
    B = 8
    x = jax.random.normal(kx, (B, 10), jnp.float32)
    out = jax.block_until_ready(solar_forecast_forward(x, w1, b1, w2, b2))
    ref = _reference(x, w1, b1, w2, b2)
    assert out.shape == (B, 1)
    assert jnp.allclose(out, ref, atol=1e-4, rtol=1e-4)

    # 2) Multi-tile grid + bf16 streaming (halved HBM traffic); looser tolerance by design.
    B2 = 1000
    x2 = jax.random.normal(kx2, (B2, 10), jnp.float32)
    out2 = jax.block_until_ready(
        solar_forecast_forward(x2, w1, b1, w2, b2, compute_dtype=jnp.bfloat16))
    ref2 = _reference(x2, w1, b1, w2, b2)
    assert out2.shape == (B2, 1)
    assert jnp.allclose(out2, ref2, atol=3e-2, rtol=3e-2)

    print("KERNEL_OK")
</pallas_src>

<mosaic_0001>
module attributes {stable_mosaic.version = 11 : i64} {
  func.func @mlp_kernel(%arg0: i32, %arg1: memref<10x128xf32, #tpu.memory_space<vmem>>, %arg2: memref<50x10xf32, #tpu.memory_space<vmem>>, %arg3: memref<50x1xf32, #tpu.memory_space<vmem>>, %arg4: memref<1x50xf32, #tpu.memory_space<vmem>>, %arg5: memref<1xf32, #tpu.memory_space<smem>>, %arg6: memref<1x128xf32, #tpu.memory_space<vmem>>) attributes {dimension_semantics = [#tpu.dimension_semantics<parallel>], iteration_bounds = array<i64: 1>, scalar_prefetch = 0 : i64, scratch_operands = 0 : i64, tpu.core_type = #tpu.core_type<tc>, window_params = [{transform_indices = @transform_0, window_bounds = array<i64: 10, 128>}, {pipeline_mode = #tpu.pipeline_mode<synchronous>, transform_indices = @transform_1, window_bounds = array<i64: 50, 10>}, {pipeline_mode = #tpu.pipeline_mode<synchronous>, transform_indices = @transform_2, window_bounds = array<i64: 50, 1>}, {pipeline_mode = #tpu.pipeline_mode<synchronous>, transform_indices = @transform_3, window_bounds = array<i64: 1, 50>}, {transform_indices = @transform_4, window_bounds = array<i64: 1>}, {transform_indices = @transform_5, window_bounds = array<i64: 1, 128>}]} {
    %c0 = arith.constant 0 : index
    %c0_0 = arith.constant 0 : index
    %0 = vector.load %arg2[%c0, %c0_0] : memref<50x10xf32, #tpu.memory_space<vmem>>, vector<50x10xf32>
    %c0_1 = arith.constant 0 : index
    %c0_2 = arith.constant 0 : index
    %1 = vector.load %arg1[%c0_1, %c0_2] : memref<10x128xf32, #tpu.memory_space<vmem>>, vector<10x128xf32>
    %cst = arith.constant dense<0.000000e+00> : vector<50x128xf32>
    %2 = tpu.matmul %0, %1, %cst {dimension_numbers = #tpu.dot_dimension_numbers<[1], [0], [0], [1], [0, 0, 1, 1], [], []>} : vector<50x10xf32>, vector<10x128xf32>, vector<50x128xf32> -> vector<50x128xf32>
    %c0_3 = arith.constant 0 : index
    %c0_4 = arith.constant 0 : index
    %3 = vector.load %arg3[%c0_3, %c0_4] : memref<50x1xf32, #tpu.memory_space<vmem>>, vector<50x1xf32>
    %4 = vector.broadcast %3 : vector<50x1xf32> to vector<50x128xf32>
    %5 = arith.addf %2, %4 : vector<50x128xf32>
    %cst_5 = arith.constant 0.000000e+00 : f32
    %6 = vector.broadcast %cst_5 : f32 to vector<50x128xf32>
    %7 = arith.maximumf %5, %6 : vector<50x128xf32>
    %c0_6 = arith.constant 0 : index
    %c0_7 = arith.constant 0 : index
    %8 = vector.load %arg4[%c0_6, %c0_7] : memref<1x50xf32, #tpu.memory_space<vmem>>, vector<1x50xf32>
    %cst_8 = arith.constant dense<0.000000e+00> : vector<1x128xf32>
    %9 = tpu.matmul %8, %7, %cst_8 {dimension_numbers = #tpu.dot_dimension_numbers<[1], [0], [0], [1], [0, 0, 1, 1], [], []>} : vector<1x50xf32>, vector<50x128xf32>, vector<1x128xf32> -> vector<1x128xf32>
    %c0_9 = arith.constant 0 : index
    %10 = memref.load %arg5[%c0_9] : memref<1xf32, #tpu.memory_space<smem>>
    %11 = vector.broadcast %10 : f32 to vector<1x128xf32>
    %12 = arith.addf %9, %11 : vector<1x128xf32>
    %c0_10 = arith.constant 0 : index
    %c0_11 = arith.constant 0 : index
    %13 = vector.load %arg6[%c0_10, %c0_11] : memref<1x128xf32, #tpu.memory_space<vmem>>, vector<1x128xf32>
    tpu.vector_store %arg6[%c0_10, %c0_11], %12 {strides = array<i32>} : memref<1x128xf32, #tpu.memory_space<vmem>>, vector<1x128xf32>,
    return
  }
  func.func @transform_0(%arg0: i32) -> (i32, i32) {
    %c0_i32 = arith.constant 0 : i32
    %c0_i32_0 = arith.constant 0 : i32
    return %c0_i32, %arg0 : i32, i32
  }
  func.func @transform_1(%arg0: i32) -> (i32, i32) {
    %c0_i32 = arith.constant 0 : i32
    %c0_i32_0 = arith.constant 0 : i32
    %c0_i32_1 = arith.constant 0 : i32
    return %c0_i32, %c0_i32_0 : i32, i32
  }
  func.func @transform_2(%arg0: i32) -> (i32, i32) {
    %c0_i32 = arith.constant 0 : i32
    %c0_i32_0 = arith.constant 0 : i32
    %c0_i32_1 = arith.constant 0 : i32
    return %c0_i32, %c0_i32_0 : i32, i32
  }
  func.func @transform_3(%arg0: i32) -> (i32, i32) {
    %c0_i32 = arith.constant 0 : i32
    %c0_i32_0 = arith.constant 0 : i32
    %c0_i32_1 = arith.constant 0 : i32
    return %c0_i32, %c0_i32_0 : i32, i32
  }
  func.func @transform_4(%arg0: i32) -> i32 {
    %c0_i32 = arith.constant 0 : i32
    %c0_i32_0 = arith.constant 0 : i32
    return %c0_i32 : i32
  }
  func.func @transform_5(%arg0: i32) -> (i32, i32) {
    %c0_i32 = arith.constant 0 : i32
    %c0_i32_0 = arith.constant 0 : i32
    return %c0_i32, %arg0 : i32, i32
  }
}

</mosaic_0001>

<llo_original>
// kernel: solar_forecast_forward.1
$region0: #{solar_forecast_forward.1}
  #allocation0 [shape = 'u32[]', space=smem, size = 0x4, offset = 0x4, fixed_abs, tag = 'smem constant byte address 0x4 - core index']
  #allocation1 [shape = 'u32[72,128]{1,0:T(1,128)}', space=vmem, size = 0x9000, scoped, tag = 'internal scratch']
  #allocation2 [shape = 'f32[1]{0:T(128)S(6)}', space=smem, size = 0x200, scoped, tag = 'scoped memory for solar_forecast_forward.1']
  %s0 = inlined_call_operand.vmem [shape: f32[10,128], index: 0, kind: input, shape index: {}]
  %s1 = inlined_call_operand.vmem [shape: f32[50,10], index: 1, kind: input, shape index: {}]
  %s2 = inlined_call_operand.vmem [shape: f32[50,1], index: 2, kind: input, shape index: {}]
  %s3 = inlined_call_operand.vmem [shape: f32[1,50], index: 3, kind: input, shape index: {}]
  %s4 = inlined_call_operand.<no memory space> [shape: f32[1], index: 4, kind: input, shape index: {}]
  %s5 = inlined_call_operand.vmem [shape: f32[1,128], index: 5, kind: output, shape index: {}]
  %s6 = sld [smem:[#allocation0]]
  $region30: #{solar_forecast_forward.1} parent=0
    _
  %s8 = ssub.s32 1, %s6
  %s9 = scalar_select 0, %s8, %s6
  %10 = sst [smem:[#allocation2]] %s4
  // Predicated region
  $region2: #{solar_forecast_forward.1} parent=0 // pred_check
    _
  $region3: #{solar_forecast_forward.1} parent=0 // pred_check_branch
    %12 = sbr.rel (0) target = $region5
  $region4: #{solar_forecast_forward.1} parent=0 // pred_region
    _
  $region5: #{solar_forecast_forward.1} parent=0 // pred_fallthru
    _
  // Predicated region
  $region6: #{solar_forecast_forward.1} parent=0 // pred_check
    _
  $region7: #{solar_forecast_forward.1} parent=0 // pred_check_branch
    %14 = sbr.rel (0) target = $region9
  $region8: #{solar_forecast_forward.1} parent=0 // pred_region
    _
  $region9: #{solar_forecast_forward.1} parent=0 // pred_fallthru
    _
  // Predicated region
  $region10: #{solar_forecast_forward.1} parent=0 // pred_check
    _
  $region11: #{solar_forecast_forward.1} parent=0 // pred_check_branch
    %16 = sbr.rel (0) target = $region13
  $region12: #{solar_forecast_forward.1} parent=0 // pred_region
    _
  $region13: #{solar_forecast_forward.1} parent=0 // pred_fallthru
    _
  // Predicated region
  $region14: #{solar_forecast_forward.1} parent=0 // pred_check
    _
  $region15: #{solar_forecast_forward.1} parent=0 // pred_check_branch
    %18 = sbr.rel (0) target = $region17
  $region16: #{solar_forecast_forward.1} parent=0 // pred_region
    _
  $region17: #{solar_forecast_forward.1} parent=0 // pred_fallthru
    _
  // Predicated region
  $region18: #{solar_forecast_forward.1} parent=0 // pred_check
    _
  $region19: #{solar_forecast_forward.1} parent=0 // pred_check_branch
    %20 = sbr.rel (0) target = $region21
  $region20: #{solar_forecast_forward.1} parent=0 // pred_region
    _
  $region21: #{solar_forecast_forward.1} parent=0 // pred_fallthru
    _
  %v21 = vld [vmem:[%s1] sm:$0xff]
  %v22 = vld [vmem:[%s1 + $0x8] sm:$0xff]
  %v23 = vld [vmem:[%s1 + $0x10] sm:$0xff]
  %v24 = vld [vmem:[%s1 + $0x18] sm:$0xff]
  %v25 = vld [vmem:[%s1 + $0x20] sm:$0xff]
  %v26 = vld [vmem:[%s1 + $0x28] sm:$0xff]
  %v27 = vld [vmem:[%s1 + $0x30] sm:$0x3]
  %v28 = vld [vmem:[%s0] sm:$0xff]
  %v29 = vld [vmem:[%s0 + $0x8] sm:$0x3]
  %v30 = vld [vmem:[%s2] sm:$0xff]
  %v31 = vld [vmem:[%s2 + $0x8] sm:$0xff]
  %v32 = vld [vmem:[%s2 + $0x10] sm:$0xff]
  %v33 = vld [vmem:[%s2 + $0x18] sm:$0xff]
  %v34 = vld [vmem:[%s2 + $0x20] sm:$0xff]
  %v35 = vld [vmem:[%s2 + $0x28] sm:$0xff]
  %v36 = vld [vmem:[%s2 + $0x30] sm:$0x3]
  %38 = vset.pattern.permute.xlu0 0
  %39 = vperm.xlu0 %38, %v30
  %v40 = vpop.permute.xlu0 %39
  %43 = vset.pattern.permute.xlu0 0
  %44 = vperm.xlu0 %43, %v31
  %v45 = vpop.permute.xlu0 %44
  %48 = vset.pattern.permute.xlu0 0
  %49 = vperm.xlu0 %48, %v32
  %v50 = vpop.permute.xlu0 %49
  %53 = vset.pattern.permute.xlu0 0
  %54 = vperm.xlu0 %53, %v33
  %v55 = vpop.permute.xlu0 %54
  %58 = vset.pattern.permute.xlu0 0
  %59 = vperm.xlu0 %58, %v34
  %v60 = vpop.permute.xlu0 %59
  %63 = vset.pattern.permute.xlu0 0
  %64 = vperm.xlu0 %63, %v35
  %v65 = vpop.permute.xlu0 %64
  %68 = vset.pattern.permute.xlu0 0
  %69 = vperm.xlu0 %68, %v36
  %v70 = vpop.permute.xlu0 %69
  %vm72 = vcmask 80896
  %v74 = vsel %vm72, %v21, 0
  %v77 = vsel %vm72, %v22, 0
  %v80 = vsel %vm72, %v23, 0
  %v83 = vsel %vm72, %v24, 0
  %v86 = vsel %vm72, %v25, 0
  %v89 = vsel %vm72, %v26, 0
  %v92 = vsel %vm72, %v27, 0
  %vm94 = vcmask 1041408
  %v96 = vsel %vm94, %v29, 0
  %98 = vmatpush.msra.mxu0 0.0
  %99 = vmatpush.msra.mxu0 0.0
  %100 = vmatpush.msra.mxu0 0.0
  %101 = vmatpush.msra.mxu0 0.0
  %102 = vmatpush.msra.mxu0 0.0
  %103 = vmatpush.msra.mxu0 0.0
  %104 = vmatpush.msra.mxu0 0.0
  %105 = vmatpush.msra.mxu0 0.0
  %106 = vmatpush.msra.mxu0 0.0
  %107 = vmatpush.msra.mxu0 0.0
  %108 = vmatpush.msra.mxu0 0.0
  %109 = vmatpush.msra.mxu0 0.0
  %110 = vmatpush.msra.mxu0 0.0
  %111 = vmatpush.msra.mxu0 0.0
  %112 = vmatpush.msra.mxu0 %v96
  %113 = vmatpush.msra.mxu0 %v28
  %114 = vmatmul.f32.gmra.mxu0 %v74
  %v115 = vpop.f32.mrf.mxu0
  %v116 = vadd.f32 %v40, %v115
  %117 = vmatmul.f32.gmra.mxu0 %v77
  %v118 = vpop.f32.mrf.mxu0
  %v119 = vadd.f32 %v45, %v118
  %120 = vmatmul.f32.gmra.mxu0 %v80
  %v121 = vpop.f32.mrf.mxu0
  %v122 = vadd.f32 %v50, %v121
  %123 = vmatmul.f32.gmra.mxu0 %v83
  %v124 = vpop.f32.mrf.mxu0
  %v125 = vadd.f32 %v55, %v124
  %126 = vmatmul.f32.gmra.mxu0 %v86
  %v127 = vpop.f32.mrf.mxu0
  %v128 = vadd.f32 %v60, %v127
  %129 = vmatmul.f32.gmra.mxu0 %v89
  %v130 = vpop.f32.mrf.mxu0
  %v131 = vadd.f32 %v65, %v130
  %132 = vmatmul.f32.gmra.mxu0 %v92
  %v133 = vpop.f32.mrf.mxu0
  %v134 = vadd.f32 %v70, %v133
  %135 = vdwg.mxu0
  %v136 = vmax.f32 %v116, 0.0
  %v137 = vmax.f32 %v119, 0.0
  %v138 = vmax.f32 %v122, 0.0
  %v139 = vmax.f32 %v125, 0.0
  %v140 = vmax.f32 %v128, 0.0
  %v141 = vmax.f32 %v131, 0.0
  %v142 = vmax.f32 %v134, 0.0
  %v143 = vld [vmem:[%s3] sm:$0x1]
  %s144 = sld [smem:[#allocation2]]
  %v145 = vstv %s144
  %vm146 = vcmask 408576
  %v148 = vsel %vm146, %v143, 0
  %v151 = vsel %vm94, %v142, 0
  %153 = vmatpush.msra.mxu0 0.0
  %154 = vmatpush.msra.mxu0 0.0
  %155 = vmatpush.msra.mxu0 0.0
  %156 = vmatpush.msra.mxu0 0.0
  %157 = vmatpush.msra.mxu0 0.0
  %158 = vmatpush.msra.mxu0 0.0
  %159 = vmatpush.msra.mxu0 0.0
  %160 = vmatpush.msra.mxu0 0.0
  %161 = vmatpush.msra.mxu0 0.0
  %162 = vmatpush.msra.mxu0 %v151
  %163 = vmatpush.msra.mxu0 %v141
  %164 = vmatpush.msra.mxu0 %v140
  %165 = vmatpush.msra.mxu0 %v139
  %166 = vmatpush.msra.mxu0 %v138
  %167 = vmatpush.msra.mxu0 %v137
  %168 = vmatpush.msra.mxu0 %v136
  %169 = vmatmul.f32.gmra.mxu0 %v148
  %v170 = vpop.f32.mrf.mxu0
  %v171 = vadd.f32 %v145, %v170
  %172 = vdwg.mxu0
  %173 = vst [vmem:[%s5] sm:$0x1] %v171
  // Predicated region
  $region22: #{solar_forecast_forward.1} parent=0 // pred_check
    _
  $region23: #{solar_forecast_forward.1} parent=0 // pred_check_branch
    %175 = sbr.rel (0) target = $region25
  $region24: #{solar_forecast_forward.1} parent=0 // pred_region
    _
  $region25: #{solar_forecast_forward.1} parent=0 // pred_fallthru
    _
  // Predicated region
  $region26: #{solar_forecast_forward.1} parent=0 // pred_check
    _
  $region27: #{solar_forecast_forward.1} parent=0 // pred_check_branch
    %177 = sbr.rel (0) target = $region29
  $region28: #{solar_forecast_forward.1} parent=0 // pred_region
    _
  $region29: #{solar_forecast_forward.1} parent=0 // pred_fallthru
    _

</llo_original>
